<compile_context>
chip_gen: v7x
topology: tpu7x:2x2x1
jax: 0.10.0
libtpu: 0.0.40
codegen_flags: <defaults>
</compile_context>

<pallas_src>
import functools

import numpy as np

import jax
import jax.numpy as jnp
from jax import lax
from jax.experimental import pallas as pl
from jax.experimental.pallas import tpu as pltpu


def _residual_dw_bn_kernel(x_ref, w_ref, b_ref, o_ref, *, C, H, TH):
    """One (batch, row-tile) grid step.

    x_ref : (1, H, L)   un-padded NHWC image, L = W*C on the lane axis
    w_ref : (9, L)      BN-folded 3x3 taps (+1.0 on the centre tap; pad-column
                        lanes pre-zeroed), pre-tiled to lane width
    b_ref : (1, L)      fused BN bias (f32), pre-tiled to lane width
    o_ref : (1, TH, L)  output row tile
    """
    L = o_ref.shape[2]
    row0 = pl.multiple_of(pl.program_id(1) * TH, TH)

    # One aligned load of the row band (the dy = 0 taps).
    mid = x_ref[0, pl.ds(row0, TH), :]                             # (TH, L)

    # Top / bottom halo rows: clamped single-row reads, zeroed at image edges.
    top = x_ref[0, pl.ds(jnp.maximum(row0 - 1, 0), 1), :]          # (1, L)
    bot = x_ref[0, pl.ds(jnp.minimum(row0 + TH, H - 1), 1), :]     # (1, L)
    top = top * (row0 > 0).astype(top.dtype)
    bot = bot * (row0 + TH < H).astype(bot.dtype)

    # dy = -1 / +1 bands via sublane rotation of `mid`; patch the one wrapped
    # row with the halo row (XLU roll + one select per band).
    row_ids = lax.broadcasted_iota(jnp.int32, (TH, L), 0)
    up = jnp.where(row_ids == 0, top, pltpu.roll(mid, 1, axis=0))
    down = jnp.where(row_ids == TH - 1, bot, pltpu.roll(mid, TH - 1, axis=0))

    def tap(band, k):
        # product stays in the input dtype (bf16 on v6e/v7x), accumulate f32
        return (band * w_ref[k, :]).astype(jnp.float32)

    # Centre tap carries the residual (+1.0 folded into w_ref[4]) and BN bias.
    acc = tap(mid, 4) + b_ref[0, :]
    acc = acc + tap(up, 1) + tap(down, 7)
    # dx = -1 / +1 taps: lane rotation by +/-C; the lanes that wrap across the
    # image's left/right border are killed by the zeroed weight lanes baked
    # into w_ref rows {0,3,6} (kx=0) and {2,5,8} (kx=2) -> no in-kernel masks.
    acc = acc + tap(pltpu.roll(up, C, axis=1), 0)
    acc = acc + tap(pltpu.roll(up, L - C, axis=1), 2)
    acc = acc + tap(pltpu.roll(mid, C, axis=1), 3)
    acc = acc + tap(pltpu.roll(mid, L - C, axis=1), 5)
    acc = acc + tap(pltpu.roll(down, C, axis=1), 6)
    acc = acc + tap(pltpu.roll(down, L - C, axis=1), 8)

    o_ref[0, :, :] = acc.astype(o_ref.dtype)


def residual_dw_conv_bn_nhwc(x_nhwc, w_dw, bn_gamma, bn_beta, bn_mean, bn_var,
                             eps=1e-5):
    """Preferred TPU entry point.  x_nhwc: (N, H, W, C); w_dw: (C, 3, 3)."""
    N, H, W, C = x_nhwc.shape
    L = W * C
    x = x_nhwc.reshape(N, H, L)                       # contiguous merge, no copy

    # Fold BN into the conv weights/bias, the residual into the centre tap,
    # and the left/right zero-pad columns into zeroed weight lanes.
    scale = (bn_gamma / jnp.sqrt(bn_var + eps)).astype(jnp.float32)       # (C,)
    bias = (bn_beta - bn_mean * scale).astype(jnp.float32)                # (C,)
    w9 = jnp.transpose(w_dw.astype(jnp.float32) * scale[:, None, None],
                       (1, 2, 0)).reshape(9, C)       # tap (ky*3+kx) x C
    w9 = w9.at[4].add(1.0)                            # residual folded in
    w_flat = jnp.tile(w9, (1, W))                     # (9, W*C)

    kx = np.arange(9) % 3
    col = np.arange(L) // C
    keep = np.ones((9, L), np.float32)
    keep[kx == 0] = (col >= 1).astype(np.float32)       # left-neighbour taps
    keep[kx == 2] = (col <= W - 2).astype(np.float32)   # right-neighbour taps
    w_flat = (w_flat * jnp.asarray(keep)).astype(x.dtype)
    b_flat = jnp.tile(bias, W).reshape(1, L)            # (1, L) f32

    # Row tile: whole image per grid step for RepViT-size maps (56/28/14/7),
    # otherwise the largest multiple-of-8 divisor keeping the live slab modest.
    TH = H
    if H * L * 4 > 160 * 1024:
        for cand in (64, 32, 16, 8):
            if H % cand == 0 and cand * L * 4 <= 160 * 1024:
                TH = cand
                break

    itemsize = jnp.dtype(x.dtype).itemsize
    est = 2 * H * L * itemsize + 2 * TH * L * itemsize + 12 * L * 4
    # stay well under the v7x 64 MiB VMEM while allowing > default on v5e/v6e
    vmem_limit = int(min(max(4 * est, 32 * 1024 * 1024), 48 * 1024 * 1024))

    out = pl.pallas_call(
        functools.partial(_residual_dw_bn_kernel, C=C, H=H, TH=TH),
        out_shape=jax.ShapeDtypeStruct((N, H, L), x.dtype),
        grid_spec=pltpu.PrefetchScalarGridSpec(
            num_scalar_prefetch=0,
            grid=(N, H // TH),
            in_specs=[
                # image: DMA'd once per batch, resident across the row tiles
                pl.BlockSpec((1, H, L), lambda n, r: (n, 0, 0)),
                pl.BlockSpec((9, L), lambda n, r: (0, 0)),
                pl.BlockSpec((1, L), lambda n, r: (0, 0)),
            ],
            out_specs=pl.BlockSpec((1, TH, L), lambda n, r: (n, r, 0)),
        ),
        compiler_params=pltpu.CompilerParams(
            # batch axis parallel (v7x two-TC sharding); row axis arbitrary so
            # both cores never re-fetch the same resident image block
            dimension_semantics=("parallel", "arbitrary"),
            vmem_limit_bytes=vmem_limit),
    )(x, w_flat, b_flat)

    return out.reshape(N, H, W, C)


def residual_dw_conv_bn(x_nchw, w_dw, bn_gamma, bn_beta, bn_mean, bn_var,
                        eps=1e-5):
    """NCHW adapter mirroring the PyTorch module's tensor layout."""
    # TODO(synk): in a full RepViT TPU port keep activations NHWC end-to-end so
    # these two transposes (extra HBM round trips) disappear from the graph.
    x_nhwc = jnp.transpose(x_nchw, (0, 2, 3, 1))
    y = residual_dw_conv_bn_nhwc(x_nhwc, w_dw, bn_gamma, bn_beta, bn_mean,
                                 bn_var, eps)
    return jnp.transpose(y, (0, 3, 1, 2))


def _reference(x_nchw, w_dw, bn_gamma, bn_beta, bn_mean, bn_var, eps=1e-5):
    """Plain-JAX reference: x + BN(depthwise_conv3x3(x)), NCHW."""
    C = x_nchw.shape[1]
    w = w_dw[:, None, :, :]  # (C, 1, 3, 3) == torch depthwise conv weight
    conv = jax.lax.conv_general_dilated(
        x_nchw.astype(jnp.float32), w.astype(jnp.float32),
        window_strides=(1, 1), padding=((1, 1), (1, 1)),
        dimension_numbers=("NCHW", "OIHW", "NCHW"),
        feature_group_count=C)
    scale = (bn_gamma / jnp.sqrt(bn_var + eps))[None, :, None, None]
    bias = (bn_beta - bn_mean * bn_gamma / jnp.sqrt(bn_var + eps))[None, :, None, None]
    return x_nchw + conv * scale + bias


if __name__ == "__main__":
    key = jax.random.PRNGKey(0)
    k_x, k_w, k_g, k_b, k_m, k_v = jax.random.split(key, 6)

    # channels=8 so the flattened lane axis W*C = 128 is store-dense.
    N, C, H, W = 2, 8, 16, 16
    x_nchw = jax.random.normal(k_x, (N, C, H, W), dtype=jnp.float32)

    # Conv2d(dim, dim, 3, 1, 1, groups=dim, bias=False): weight (C, 1, 3, 3)
    w_dw = jax.random.normal(k_w, (C, 3, 3), dtype=jnp.float32) * 0.1
    # BatchNorm2d(C) with non-trivial running stats to exercise the BN fusion.
    bn_gamma = 1.0 + 0.1 * jax.random.normal(k_g, (C,), jnp.float32)
    bn_beta = 0.1 * jax.random.normal(k_b, (C,), jnp.float32)
    bn_mean = 0.1 * jax.random.normal(k_m, (C,), jnp.float32)
    bn_var = jnp.abs(jax.random.normal(k_v, (C,), jnp.float32)) + 0.5

    ref = _reference(x_nchw, w_dw, bn_gamma, bn_beta, bn_mean, bn_var)

    # NHWC-native hot path (no pad / transpose HBM round trips).
    x_nhwc = jnp.transpose(x_nchw, (0, 2, 3, 1))
    out_nhwc = residual_dw_conv_bn_nhwc(x_nhwc, w_dw, bn_gamma, bn_beta,
                                        bn_mean, bn_var)
    out_nhwc = jax.block_until_ready(out_nhwc)
    assert out_nhwc.shape == (N, H, W, C)
    assert jnp.allclose(jnp.transpose(out_nhwc, (0, 3, 1, 2)), ref,
                        atol=1e-5, rtol=1e-5)

    # NCHW adapter matching the PyTorch module's layout exactly.
    out_nchw = jax.block_until_ready(
        residual_dw_conv_bn(x_nchw, w_dw, bn_gamma, bn_beta, bn_mean, bn_var))
    assert out_nchw.shape == (N, C, H, W)
    assert jnp.allclose(out_nchw, ref, atol=1e-5, rtol=1e-5)

    # TODO(synk): training-mode drop-path (per-sample Bernoulli mask / (1-p))
    # is not implemented; this covers the eval forward y = x + BN(dwconv(x)).
    print("KERNEL_OK")
</pallas_src>

<mosaic_0001>
module attributes {stable_mosaic.version = 11 : i64} {
  func.func @_residual_dw_bn_kernel(%arg0: i32, %arg1: i32, %arg2: memref<1x16x128xf32, #tpu.memory_space<vmem>>, %arg3: memref<9x128xf32, #tpu.memory_space<vmem>>, %arg4: memref<1x128xf32, #tpu.memory_space<vmem>>, %arg5: memref<1x16x128xf32, #tpu.memory_space<vmem>>) attributes {dimension_semantics = [#tpu.dimension_semantics<parallel>, #tpu.dimension_semantics<arbitrary>], iteration_bounds = array<i64: 2, 1>, scalar_prefetch = 0 : i64, scratch_operands = 0 : i64, tpu.core_type = #tpu.core_type<tc>, window_params = [{transform_indices = @transform_0, window_bounds = array<i64: 1, 16, 128>}, {pipeline_mode = #tpu.pipeline_mode<synchronous>, transform_indices = @transform_1, window_bounds = array<i64: 9, 128>}, {pipeline_mode = #tpu.pipeline_mode<synchronous>, transform_indices = @transform_2, window_bounds = array<i64: 1, 128>}, {transform_indices = @transform_3, window_bounds = array<i64: 1, 16, 128>}]} {
    %c16_i32 = arith.constant 16 : i32
    %0 = arith.muli %arg1, %c16_i32 : i32
    %1 = tpu.assume_multiple %0, 16 : i32
    %c0 = arith.constant 0 : index
    %2 = arith.index_cast %1 : i32 to index
    %c0_0 = arith.constant 0 : index
    %3 = vector.load %arg2[%c0, %2, %c0_0] : memref<1x16x128xf32, #tpu.memory_space<vmem>>, vector<1x16x128xf32>
    %4 = vector.shape_cast %3 : vector<1x16x128xf32> to vector<16x128xf32>
    %c1_i32 = arith.constant 1 : i32
    %5 = arith.subi %1, %c1_i32 : i32
    %c0_i32 = arith.constant 0 : i32
    %6 = arith.maxsi %5, %c0_i32 : i32
    %c0_1 = arith.constant 0 : index
    %7 = arith.index_cast %6 : i32 to index
    %c0_2 = arith.constant 0 : index
    %8 = vector.load %arg2[%c0_1, %7, %c0_2] : memref<1x16x128xf32, #tpu.memory_space<vmem>>, vector<1x1x128xf32>
    %9 = vector.shape_cast %8 : vector<1x1x128xf32> to vector<1x128xf32>
    %c16_i32_3 = arith.constant 16 : i32
    %10 = arith.addi %1, %c16_i32_3 : i32
    %c15_i32 = arith.constant 15 : i32
    %11 = arith.minsi %10, %c15_i32 : i32
    %c0_4 = arith.constant 0 : index
    %12 = arith.index_cast %11 : i32 to index
    %c0_5 = arith.constant 0 : index
    %13 = vector.load %arg2[%c0_4, %12, %c0_5] : memref<1x16x128xf32, #tpu.memory_space<vmem>>, vector<1x1x128xf32>
    %14 = vector.shape_cast %13 : vector<1x1x128xf32> to vector<1x128xf32>
    %c0_i32_6 = arith.constant 0 : i32
    %15 = arith.cmpi sgt, %1, %c0_i32_6 : i32
    %16 = arith.extui %15 : i1 to i32
    %17 = arith.sitofp %16 : i32 to f32
    %18 = vector.broadcast %17 : f32 to vector<1x128xf32>
    %19 = arith.mulf %9, %18 : vector<1x128xf32>
    %c16_i32_7 = arith.constant 16 : i32
    %20 = arith.addi %1, %c16_i32_7 : i32
    %c16_i32_8 = arith.constant 16 : i32
    %21 = arith.cmpi slt, %20, %c16_i32_8 : i32
    %22 = arith.extui %21 : i1 to i32
    %23 = arith.sitofp %22 : i32 to f32
    %24 = vector.broadcast %23 : f32 to vector<1x128xf32>
    %25 = arith.mulf %14, %24 : vector<1x128xf32>
    %26 = tpu.iota {dimensions = array<i32: 0>} : vector<16x128xi32>
    %c0_i32_9 = arith.constant 0 : i32
    %27 = vector.broadcast %c0_i32_9 : i32 to vector<16x128xi32>
    %28 = arith.cmpi eq, %26, %27 : vector<16x128xi32>
    %c1_i32_10 = arith.constant 1 : i32
    %29 = tpu.dynamic_rotate %4 by %c1_i32_10 dim 0 : vector<16x128xf32>, i32 -> vector<16x128xf32>
    %30 = vector.shape_cast %19 : vector<1x128xf32> to vector<1x128xf32>
    %31 = vector.broadcast %30 : vector<1x128xf32> to vector<16x128xf32>
    %32 = arith.select %28, %31, %29 : vector<16x128xi1>, vector<16x128xf32>
    %c15_i32_11 = arith.constant 15 : i32
    %33 = vector.broadcast %c15_i32_11 : i32 to vector<16x128xi32>
    %34 = arith.cmpi eq, %26, %33 : vector<16x128xi32>
    %c15_i32_12 = arith.constant 15 : i32
    %35 = tpu.dynamic_rotate %4 by %c15_i32_12 dim 0 : vector<16x128xf32>, i32 -> vector<16x128xf32>
    %36 = vector.shape_cast %25 : vector<1x128xf32> to vector<1x128xf32>
    %37 = vector.broadcast %36 : vector<1x128xf32> to vector<16x128xf32>
    %38 = arith.select %34, %37, %35 : vector<16x128xi1>, vector<16x128xf32>
    %c4 = arith.constant 4 : index
    %c0_13 = arith.constant 0 : index
    %39 = vector.load %arg3[%c4, %c0_13] : memref<9x128xf32, #tpu.memory_space<vmem>>, vector<1x128xf32>
    %40 = vector.shape_cast %39 : vector<1x128xf32> to vector<128xf32>
    %41 = vector.shape_cast %40 : vector<128xf32> to vector<1x128xf32>
    %42 = vector.broadcast %41 : vector<1x128xf32> to vector<16x128xf32>
    %43 = arith.mulf %4, %42 : vector<16x128xf32>
    %c0_14 = arith.constant 0 : index
    %c0_15 = arith.constant 0 : index
    %44 = vector.load %arg4[%c0_14, %c0_15] : memref<1x128xf32, #tpu.memory_space<vmem>>, vector<1x128xf32>
    %45 = vector.shape_cast %44 : vector<1x128xf32> to vector<128xf32>
    %46 = vector.shape_cast %45 : vector<128xf32> to vector<1x128xf32>
    %47 = vector.broadcast %46 : vector<1x128xf32> to vector<16x128xf32>
    %48 = arith.addf %43, %47 : vector<16x128xf32>
    %c1 = arith.constant 1 : index
    %c0_16 = arith.constant 0 : index
    %49 = vector.load %arg3[%c1, %c0_16] : memref<9x128xf32, #tpu.memory_space<vmem>>, vector<1x128xf32>
    %50 = vector.shape_cast %49 : vector<1x128xf32> to vector<128xf32>
    %51 = vector.shape_cast %50 : vector<128xf32> to vector<1x128xf32>
    %52 = vector.broadcast %51 : vector<1x128xf32> to vector<16x128xf32>
    %53 = arith.mulf %32, %52 : vector<16x128xf32>
    %54 = arith.addf %48, %53 : vector<16x128xf32>
    %c7 = arith.constant 7 : index
    %c0_17 = arith.constant 0 : index
    %55 = vector.load %arg3[%c7, %c0_17] : memref<9x128xf32, #tpu.memory_space<vmem>>, vector<1x128xf32>
    %56 = vector.shape_cast %55 : vector<1x128xf32> to vector<128xf32>
    %57 = vector.shape_cast %56 : vector<128xf32> to vector<1x128xf32>
    %58 = vector.broadcast %57 : vector<1x128xf32> to vector<16x128xf32>
    %59 = arith.mulf %38, %58 : vector<16x128xf32>
    %60 = arith.addf %54, %59 : vector<16x128xf32>
    %c8_i32 = arith.constant 8 : i32
    %61 = tpu.dynamic_rotate %32 by %c8_i32 dim 1 : vector<16x128xf32>, i32 -> vector<16x128xf32>
    %c0_18 = arith.constant 0 : index
    %c0_19 = arith.constant 0 : index
    %62 = vector.load %arg3[%c0_18, %c0_19] : memref<9x128xf32, #tpu.memory_space<vmem>>, vector<1x128xf32>
    %63 = vector.shape_cast %62 : vector<1x128xf32> to vector<128xf32>
    %64 = vector.shape_cast %63 : vector<128xf32> to vector<1x128xf32>
    %65 = vector.broadcast %64 : vector<1x128xf32> to vector<16x128xf32>
    %66 = arith.mulf %61, %65 : vector<16x128xf32>
    %67 = arith.addf %60, %66 : vector<16x128xf32>
    %c120_i32 = arith.constant 120 : i32
    %68 = tpu.dynamic_rotate %32 by %c120_i32 dim 1 : vector<16x128xf32>, i32 -> vector<16x128xf32>
    %c2 = arith.constant 2 : index
    %c0_20 = arith.constant 0 : index
    %69 = vector.load %arg3[%c2, %c0_20] : memref<9x128xf32, #tpu.memory_space<vmem>>, vector<1x128xf32>
    %70 = vector.shape_cast %69 : vector<1x128xf32> to vector<128xf32>
    %71 = vector.shape_cast %70 : vector<128xf32> to vector<1x128xf32>
    %72 = vector.broadcast %71 : vector<1x128xf32> to vector<16x128xf32>
    %73 = arith.mulf %68, %72 : vector<16x128xf32>
    %74 = arith.addf %67, %73 : vector<16x128xf32>
    %c8_i32_21 = arith.constant 8 : i32
    %75 = tpu.dynamic_rotate %4 by %c8_i32_21 dim 1 : vector<16x128xf32>, i32 -> vector<16x128xf32>
    %c3 = arith.constant 3 : index
    %c0_22 = arith.constant 0 : index
    %76 = vector.load %arg3[%c3, %c0_22] : memref<9x128xf32, #tpu.memory_space<vmem>>, vector<1x128xf32>
    %77 = vector.shape_cast %76 : vector<1x128xf32> to vector<128xf32>
    %78 = vector.shape_cast %77 : vector<128xf32> to vector<1x128xf32>
    %79 = vector.broadcast %78 : vector<1x128xf32> to vector<16x128xf32>
    %80 = arith.mulf %75, %79 : vector<16x128xf32>
    %81 = arith.addf %74, %80 : vector<16x128xf32>
    %c120_i32_23 = arith.constant 120 : i32
    %82 = tpu.dynamic_rotate %4 by %c120_i32_23 dim 1 : vector<16x128xf32>, i32 -> vector<16x128xf32>
    %c5 = arith.constant 5 : index
    %c0_24 = arith.constant 0 : index
    %83 = vector.load %arg3[%c5, %c0_24] : memref<9x128xf32, #tpu.memory_space<vmem>>, vector<1x128xf32>
    %84 = vector.shape_cast %83 : vector<1x128xf32> to vector<128xf32>
    %85 = vector.shape_cast %84 : vector<128xf32> to vector<1x128xf32>
    %86 = vector.broadcast %85 : vector<1x128xf32> to vector<16x128xf32>
    %87 = arith.mulf %82, %86 : vector<16x128xf32>
    %88 = arith.addf %81, %87 : vector<16x128xf32>
    %c8_i32_25 = arith.constant 8 : i32
    %89 = tpu.dynamic_rotate %38 by %c8_i32_25 dim 1 : vector<16x128xf32>, i32 -> vector<16x128xf32>
    %c6 = arith.constant 6 : index
    %c0_26 = arith.constant 0 : index
    %90 = vector.load %arg3[%c6, %c0_26] : memref<9x128xf32, #tpu.memory_space<vmem>>, vector<1x128xf32>
    %91 = vector.shape_cast %90 : vector<1x128xf32> to vector<128xf32>
    %92 = vector.shape_cast %91 : vector<128xf32> to vector<1x128xf32>
    %93 = vector.broadcast %92 : vector<1x128xf32> to vector<16x128xf32>
    %94 = arith.mulf %89, %93 : vector<16x128xf32>
    %95 = arith.addf %88, %94 : vector<16x128xf32>
    %c120_i32_27 = arith.constant 120 : i32
    %96 = tpu.dynamic_rotate %38 by %c120_i32_27 dim 1 : vector<16x128xf32>, i32 -> vector<16x128xf32>
    %c8 = arith.constant 8 : index
    %c0_28 = arith.constant 0 : index
    %97 = vector.load %arg3[%c8, %c0_28] : memref<9x128xf32, #tpu.memory_space<vmem>>, vector<1x128xf32>
    %98 = vector.shape_cast %97 : vector<1x128xf32> to vector<128xf32>
    %99 = vector.shape_cast %98 : vector<128xf32> to vector<1x128xf32>
    %100 = vector.broadcast %99 : vector<1x128xf32> to vector<16x128xf32>
    %101 = arith.mulf %96, %100 : vector<16x128xf32>
    %102 = arith.addf %95, %101 : vector<16x128xf32>
    %c0_29 = arith.constant 0 : index
    %c0_30 = arith.constant 0 : index
    %c0_31 = arith.constant 0 : index
    %103 = vector.load %arg5[%c0_29, %c0_30, %c0_31] : memref<1x16x128xf32, #tpu.memory_space<vmem>>, vector<1x16x128xf32>
    %104 = vector.shape_cast %103 : vector<1x16x128xf32> to vector<16x128xf32>
    %105 = vector.shape_cast %102 : vector<16x128xf32> to vector<1x16x128xf32>
    tpu.vector_store %arg5[%c0_29, %c0_30, %c0_31], %105 {strides = array<i32>} : memref<1x16x128xf32, #tpu.memory_space<vmem>>, vector<1x16x128xf32>,
    return
  }
  func.func @transform_0(%arg0: i32, %arg1: i32) -> (i32, i32, i32) {
    %c0_i32 = arith.constant 0 : i32
    %c0_i32_0 = arith.constant 0 : i32
    %c0_i32_1 = arith.constant 0 : i32
    return %arg0, %c0_i32, %c0_i32_0 : i32, i32, i32
  }
  func.func @transform_1(%arg0: i32, %arg1: i32) -> (i32, i32) {
    %c0_i32 = arith.constant 0 : i32
    %c0_i32_0 = arith.constant 0 : i32
    %c0_i32_1 = arith.constant 0 : i32
    return %c0_i32, %c0_i32_0 : i32, i32
  }
  func.func @transform_2(%arg0: i32, %arg1: i32) -> (i32, i32) {
    %c0_i32 = arith.constant 0 : i32
    %c0_i32_0 = arith.constant 0 : i32
    %c0_i32_1 = arith.constant 0 : i32
    return %c0_i32, %c0_i32_0 : i32, i32
  }
  func.func @transform_3(%arg0: i32, %arg1: i32) -> (i32, i32, i32) {
    %c0_i32 = arith.constant 0 : i32
    %c0_i32_0 = arith.constant 0 : i32
    return %arg0, %arg1, %c0_i32 : i32, i32, i32
  }
}

</mosaic_0001>

<llo_original>
// kernel: tpu_custom_call.1
$region0: #{tpu_custom_call.1}
  #allocation0 [shape = 'u32[]', space=smem, size = 0x4, offset = 0x4, fixed_abs, tag = 'smem constant byte address 0x4 - core index']
  #allocation1 [shape = 'u32[144,128]{1,0:T(1,128)}', space=vmem, size = 0x12000, scoped, tag = 'internal scratch']
  %s0 = inlined_call_operand.hbm [shape: f32[2,16,128], index: 0, kind: input, shape index: {}]
  %s1 = inlined_call_operand.hbm [shape: f32[9,128], index: 1, kind: input, shape index: {}]
  %s2 = inlined_call_operand.vmem [shape: f32[1,128], index: 2, kind: input, shape index: {}]
  %s3 = inlined_call_operand.hbm [shape: f32[2,16,128], index: 3, kind: output, shape index: {}]
  %s4 = sld [smem:[#allocation0]]
  $region53: #{tpu_custom_call.1} parent=0
    _
  %s6 = ssub.s32 1, %s4
  %s7 = scalar_select 0, %s6, %s4
  $region1: #{tpu_custom_call.1} parent=0
    #allocation2 [shape = 'u8[16384]{0}', space=vmem, size = 0x4000, scoped, tag = 'input window, operand 0']
    #allocation3 [shape = 's32[2]{0}', space=sflag, size = 0x8, scoped, tag = 'scoped memory for tpu_custom_call.1']
    #allocation4 [shape = 's32[2]{0}', space=sflag, size = 0x8, scoped, tag = 'scoped memory for tpu_custom_call.1']
    #allocation5 [shape = 'u8[8192]{0}', space=vmem, size = 0x2000, scoped, tag = 'input window, operand 1, single buffered']
    #allocation6 [shape = 's32[1]{0}', space=sflag, size = 0x4, scoped, tag = 'scoped memory for tpu_custom_call.1']
    #allocation7 [shape = 'u8[16384]{0}', space=vmem, size = 0x4000, scoped, tag = 'output window, operand 0']
    %8 = vsyncpa [#allocation3], 0
    %s9 = scalar_lea.sflag [#allocation3], 1
    %10 = vsyncpa %s9, 0
    %11 = vsyncpa [#allocation6], 0
    %12 = vsyncpa [#allocation4], 0
    %s13 = scalar_lea.sflag [#allocation4], 1
    %14 = vsyncpa %s13, 0
    loop: start=0, step=1, limit=4
    $region2: #{tpu_custom_call.1} parent=1 // loop_pre_header
      _
    $region3: #{tpu_custom_call.1} parent=1 // loop_header
      %s16 = sphi 0, %s20
      %p17 = scmp.ge.s32.totalorder %s16, 4
      %s23 = sphi 0, %s35
      %s24 = sphi 0, %s31
      %s25 = sphi 0, %s23
      %s26 = sphi 0, %s24
      %s27 = sphi 0, %s25
      %s28 = sphi 0, %s26
      %s38 = sphi 0, %s40
      %s41 = sphi 0, %s38
      %s42 = sphi 0, %s41
      %s58 = sphi 0, %s42
      %s62 = sphi 0, %s62
      %s64 = sphi 0, %s62
      %s65 = sphi 0, %s64
      %s79 = sphi 0, %s65
      %s83 = sphi 0, %s83
      %s85 = sphi 0, %s83
      %s86 = sphi 0, %s85
      %s100 = sphi 0, %s86
      %s108 = sphi 0, %s110
      %s111 = sphi 0, %s108
      %s112 = sphi 0, %s111
      %s128 = sphi 0, %s112
    $region4: #{tpu_custom_call.1} parent=1 // loop_header_branch
      %19 = sbr.rel (%p17) target = $region8
    $region5: #{tpu_custom_call.1} parent=1 // loop_body
      %s21 = ssub.s32 %s16, 1
      %s22 = ssub.s32 %s16, 2
      %s29 = sadd.s32 1, %s24
      %p30 = scmp.ge.s32.totalorder %s29, 1
      %s31 = scalar_select %p30, 0, %s29
      %s32 = sadd.s32 1, %s23
      %s33 = scalar_select %p30, %s32, %s23
      %p34 = scmp.ge.s32.totalorder %s33, 2
      %s35 = scalar_select %p34, 0, %s33
      %s36 = ssub.s32 %s23, %s35
      %p37 = scmp.eq.s32.totalorder %s36, 0
      %s39 = sadd.s32 %s38, 1
      %s40 = scalar_select %p37, %s38, %s39
      %p43 = pneg %p37
      %p44 = scmp.eq.s32.totalorder %s16, 1
      %p45 = por %p43, %p44
      %p46 = scmp.ne.s32.totalorder %s38, %s41
      %p47 = scmp.eq.s32.totalorder %s16, 0
      %p48 = por %p46, %p47
      %p49 = scmp.ne.s32.totalorder %s38, %s41
      %p50 = scmp.eq.s32.totalorder %s21, 1
      %p51 = por %p49, %p50
      %p52 = scmp.ne.s32.totalorder %s41, %s42
      %p53 = scmp.eq.s32.totalorder %s21, 0
      %p54 = por %p52, %p53
      %p55 = scmp.ne.s32.totalorder %s41, %s42
      %p56 = scmp.eq.s32.totalorder %s22, 1
      %p57 = por %p55, %p56
      %p59 = scmp.ne.s32.totalorder %s42, %s58
      %p60 = scmp.eq.s32.totalorder %s22, 0
      %p61 = por %p59, %p60
      %s63 = sadd.s32 %s62, 1
      %p66 = scmp.eq.s32.totalorder %s16, 1
      %p67 = scmp.ne.s32.totalorder %s62, %s64
      %p68 = scmp.eq.s32.totalorder %s16, 0
      %p69 = por %p67, %p68
      %p70 = scmp.ne.s32.totalorder %s62, %s64
      %p71 = scmp.eq.s32.totalorder %s21, 1
      %p72 = por %p70, %p71
      %p73 = scmp.ne.s32.totalorder %s64, %s65
      %p74 = scmp.eq.s32.totalorder %s21, 0
      %p75 = por %p73, %p74
      %p76 = scmp.ne.s32.totalorder %s64, %s65
      %p77 = scmp.eq.s32.totalorder %s22, 1
      %p78 = por %p76, %p77
      %p80 = scmp.ne.s32.totalorder %s65, %s79
      %p81 = scmp.eq.s32.totalorder %s22, 0
      %p82 = por %p80, %p81
      %s84 = sadd.s32 %s83, 1
      %p87 = scmp.eq.s32.totalorder %s16, 1
      %p88 = scmp.ne.s32.totalorder %s83, %s85
      %p89 = scmp.eq.s32.totalorder %s16, 0
      %p90 = por %p88, %p89
      %p91 = scmp.ne.s32.totalorder %s83, %s85
      %p92 = scmp.eq.s32.totalorder %s21, 1
      %p93 = por %p91, %p92
      %p94 = scmp.ne.s32.totalorder %s85, %s86
      %p95 = scmp.eq.s32.totalorder %s21, 0
      %p96 = por %p94, %p95
      %p97 = scmp.ne.s32.totalorder %s85, %s86
      %p98 = scmp.eq.s32.totalorder %s22, 1
      %p99 = por %p97, %p98
      %p101 = scmp.ne.s32.totalorder %s86, %s100
      %p102 = scmp.eq.s32.totalorder %s22, 0
      %p103 = por %p101, %p102
      %s104 = ssub.s32 %s23, %s35
      %s105 = ssub.s32 %s24, %s31
      %s106 = sor.u32 %s104, %s105
      %p107 = scmp.eq.s32.totalorder %s106, 0
      %s109 = sadd.s32 %s108, 1
      %s110 = scalar_select %p107, %s108, %s109
      %p113 = pneg %p107
      %p114 = scmp.eq.s32.totalorder %s16, 1
      %p115 = por %p113, %p114
      %p116 = scmp.ne.s32.totalorder %s108, %s111
      %p117 = scmp.eq.s32.totalorder %s16, 0
      %p118 = por %p116, %p117
      %p119 = scmp.ne.s32.totalorder %s108, %s111
      %p120 = scmp.eq.s32.totalorder %s21, 1
      %p121 = por %p119, %p120
      %p122 = scmp.ne.s32.totalorder %s111, %s112
      %p123 = scmp.eq.s32.totalorder %s21, 0
      %p124 = por %p122, %p123
      %p125 = scmp.ne.s32.totalorder %s111, %s112
      %p126 = scmp.eq.s32.totalorder %s22, 1
      %p127 = por %p125, %p126
      %p129 = scmp.ne.s32.totalorder %s112, %s128
      %p130 = scmp.eq.s32.totalorder %s22, 0
      %p131 = por %p129, %p130
      %p132 = scmp.le.s32.totalorder 1, %s16
      %p133 = scmp.lt.s32.totalorder %s16, 3
      %p134 = pnand %p132, %p133
      %p135 = pneg %p134
      // Predicated region
      $region9: #{tpu_custom_call.1} parent=5 // pred_check
        _
      $region10: #{tpu_custom_call.1} parent=5 // pred_check_branch
        %137 = sbr.rel (%p134) target = $region12
      $region11: #{tpu_custom_call.1} parent=5 // pred_region
        %s138 = ssub.s32 %s16, 1
        // Predicated region
        $region13: #{tpu_custom_call.1} parent=11 // pred_check
          %p139 = pneg %p75
        $region14: #{tpu_custom_call.1} parent=11 // pred_check_branch
          %141 = sbr.rel (%p139) target = $region16
        $region15: #{tpu_custom_call.1} parent=11 // pred_region
          %s143 = ssub.s32 256, 256
          %144 = vsyncadd [#allocation6], %s143
          %s145 = sshll.u32 [#allocation5], 4
          %s146 = int_to_ptr.vmem [resolvable:$true] %s145
          %151 = dma.hbm_to_vmem [thread:$0]  %s1, 256, %s146, [#allocation6], 128, 128, 8
        $region16: #{tpu_custom_call.1} parent=11 // pred_fallthru
          _
        // Predicated region
        $region17: #{tpu_custom_call.1} parent=11 // pred_check
          %p152 = pneg %p96
        $region18: #{tpu_custom_call.1} parent=11 // pred_check_branch
          %154 = sbr.rel (%p152) target = $region20
        $region19: #{tpu_custom_call.1} parent=11 // pred_region
          _
        $region20: #{tpu_custom_call.1} parent=11 // pred_fallthru
          _
      $region12: #{tpu_custom_call.1} parent=5 // pred_fallthru
        _
      %p155 = scmp.lt.s32.totalorder %s16, 2
      // Predicated region
      $region21: #{tpu_custom_call.1} parent=5 // pred_check
        %p156 = pneg %p155
      $region22: #{tpu_custom_call.1} parent=5 // pred_check_branch
        %158 = sbr.rel (%p156) target = $region24
      $region23: #{tpu_custom_call.1} parent=5 // pred_region
        // Predicated region
        $region25: #{tpu_custom_call.1} parent=23 // pred_check
          %p159 = pneg %p48
        $region26: #{tpu_custom_call.1} parent=23 // pred_check_branch
          %161 = sbr.rel (%p159) target = $region28
        $region27: #{tpu_custom_call.1} parent=23 // pred_region
          %s162 = sand.u32 %s38, 1
          %s163 = scalar_lea.sflag [#allocation3], %s162
          %s164 = sand.u32 %s38, 1
          %s165 = smul.addr %s164, 16
          %s166 = scalar_lea.vmem [#allocation2], %s165
          %s168 = ssub.s32 256, 256
          %169 = vsyncadd %s163, %s168
          %s170 = smul.addr %s23, 2
          %s171 = smul.addr %s170, 128
          %s172 = scalar_lea.hbm %s0, %s171
          %s173 = sshll.u32 %s166, 4
          %s174 = int_to_ptr.vmem [resolvable:$true] %s173
          %179 = dma.hbm_to_vmem [thread:$0]  %s172, 256, %s174, %s163, 128, 128, 8
        $region28: #{tpu_custom_call.1} parent=23 // pred_fallthru
          _
      $region24: #{tpu_custom_call.1} parent=5 // pred_fallthru
        _
      %p180 = scmp.le.s32.totalorder 1, %s16
      %p181 = scmp.lt.s32.totalorder %s16, 3
      %p182 = pnand %p180, %p181
      %p183 = pneg %p182
      // Predicated region
      $region29: #{tpu_custom_call.1} parent=5 // pred_check
        _
      $region30: #{tpu_custom_call.1} parent=5 // pred_check_branch
        %185 = sbr.rel (%p182) target = $region32
      $region31: #{tpu_custom_call.1} parent=5 // pred_region
        %s186 = ssub.s32 %s16, 1
        %s187 = sand.u32 %s41, 1
        %s188 = scalar_lea.sflag [#allocation3], %s187
        %s189 = sand.u32 %s41, 1
        %s190 = smul.addr %s189, 16
        %s191 = scalar_lea.vmem [#allocation2], %s190
        // Predicated region
        $region33: #{tpu_custom_call.1} parent=31 // pred_check
          %p192 = pneg %p54
        $region34: #{tpu_custom_call.1} parent=31 // pred_check_branch
          %194 = sbr.rel (%p192) target = $region36
        $region35: #{tpu_custom_call.1} parent=31 // pred_region
          %195 = dma.done %s188, 256
        $region36: #{tpu_custom_call.1} parent=31 // pred_fallthru
          _
        // Predicated region
        $region37: #{tpu_custom_call.1} parent=31 // pred_check
          %p196 = pneg %p75
        $region38: #{tpu_custom_call.1} parent=31 // pred_check_branch
          %198 = sbr.rel (%p196) target = $region40
        $region39: #{tpu_custom_call.1} parent=31 // pred_region
          %199 = dma.done [#allocation6], 256
        $region40: #{tpu_custom_call.1} parent=31 // pred_fallthru
          _
        %s200 = sand.u32 %s41, 1
        %s201 = scalar_lea.sflag [#allocation3], %s200
        %s202 = sand.u32 %s41, 1
        %s203 = smul.addr %s202, 16
        %s204 = scalar_lea.vmem [#allocation2], %s203
        %p205 = pneg %p54
        %p206 = pneg %p51
        %p207 = pneg %p75
        %p208 = pneg %p72
        %p209 = pneg %p96
        %p210 = pneg %p93
        %p211 = pneg %p124
        %p212 = pneg %p121
        %s213 = sand.u32 %s111, 1
        %s214 = scalar_lea.sflag [#allocation4], %s213
        %s215 = sand.u32 %s111, 1
        %s216 = smul.addr %s215, 16
        %s217 = scalar_lea.vmem [#allocation7], %s216
        %s218 = smul.u32 2, %s26
        %s219 = smul.u32 %s26, 16
        %s220 = scalar_lea.vmem %s191, %s219 [#allocation2]
        %v221 = vld [vmem:[%s220] sm:$0xff]
        %v222 = vld [vmem:[%s220 + $0x8] sm:$0xff]
        %s223 = ssub.s32 %s219, 1
        %p224 = scmp.gt.s32.totalorder %s223, 0
        %s225 = scalar_select %p224, %s223, 0
        %s226 = scalar_lea.vmem %s191, %s225 [#allocation2]
        %v227 = vld [vmem:[%s226] sm:$0x1]
        %s228 = sadd.s32 %s219, 16
        %p229 = scmp.lt.s32.totalorder %s228, 15
        %s230 = scalar_select %p229, %s228, 15
        %s231 = scalar_lea.vmem %s191, %s230 [#allocation2]
        %v232 = vld [vmem:[%s231] sm:$0x1]
        %p233 = scmp.gt.s32.totalorder %s219, 0
        %s234 = scalar_select %p233, 1, 0
        %s235 = scvt.s32.f32 %s234
        %v236 = vstv %s235
        %v237 = vmul.f32 %v227, %v236
        %p238 = scmp.lt.s32.totalorder %s228, 16
        %s239 = scalar_select %p238, 1, 0
        %s240 = scvt.s32.f32 %s239
        %v241 = vstv %s240
        %v242 = vmul.f32 %v232, %v241
        %v243 = vlaneseq
        %v244 = vshrl.u32 %v243, 7
        %v245 = vadd.s32 %v244, 8
        %vm246 = vcmp.eq.s32.totalorder %v244, 0
        %vm247 = vcmp.eq.s32.totalorder %v245, 0
        %v248 = vrot.slane %v221, 7
        %v249 = vrot.slane %v222, 7
        %vm250 = vcmp.lt.s32.totalorder %v244, 1
        %v251 = vsel %vm250, %v248, %v249
        %v252 = vsel %vm250, %v249, %v248
        %v253 = vlaneseq
        %v254 = vshrl.u32 %v253, 7
        %v255 = vsub.s32 0, %v254
        %v256 = vrot.slane %v237, %v255
        %v257 = vsel %vm246, %v256, %v252
        %v258 = vsel %vm247, %v256, %v251
        %vm259 = vcmp.eq.s32.totalorder %v244, 15
        %vm260 = vcmp.eq.s32.totalorder %v245, 15
        %v261 = vrot.slane %v221, 1
        %v262 = vrot.slane %v222, 1
        %vm263 = vcmp.lt.s32.totalorder %v244, 7
        %v264 = vsel %vm263, %v261, %v262
        %v265 = vsel %vm263, %v262, %v261
        %v266 = vlaneseq
        %v267 = vshrl.u32 %v266, 7
        %v268 = vsub.s32 0, %v267
        %v269 = vrot.slane %v242, %v268
        %v270 = vsel %vm259, %v269, %v264
        %v271 = vsel %vm260, %v269, %v265
        %v272 = vld [vmem:[#allocation5 + $0x4] sm:$0x1]
        %v273 = vlaneseq
        %v274 = vshrl.u32 %v273, 7
        %v275 = vsub.s32 0, %v274
        %v276 = vrot.slane %v272, %v275
        %v277 = vmul.f32 %v221, %v276
        %v278 = vmul.f32 %v222, %v276
        %v279 = vld [vmem:[%s2] sm:$0x1]
        %v281 = vlaneseq
        %v282 = vshrl.u32 %v281, 7
        %v283 = vsub.s32 0, %v282
        %v284 = vrot.slane %v279, %v283
        %v286 = vadd.f32 %v277, %v284
        %v287 = vadd.f32 %v278, %v284
        %v288 = vld [vmem:[#allocation5 + $0x1] sm:$0x1]
        %v289 = vlaneseq
        %v290 = vshrl.u32 %v289, 7
        %v291 = vsub.s32 0, %v290
        %v292 = vrot.slane %v288, %v291
        %v293 = vmul.f32 %v257, %v292
        %v294 = vmul.f32 %v258, %v292
        %v295 = vadd.f32 %v286, %v293
        %v296 = vadd.f32 %v287, %v294
        %v297 = vld [vmem:[#allocation5 + $0x7] sm:$0x1]
        %v298 = vlaneseq
        %v299 = vshrl.u32 %v298, 7
        %v300 = vsub.s32 0, %v299
        %v301 = vrot.slane %v297, %v300
        %v302 = vmul.f32 %v270, %v301
        %v303 = vmul.f32 %v271, %v301
        %v304 = vadd.f32 %v295, %v302
        %v305 = vadd.f32 %v296, %v303
        %306 = vrot.lane.b32.xlu0 %v257, 8
        %v307 = vpop.permute.xlu0 %306
        %308 = vrot.lane.b32.xlu0 %v258, 8
        %v309 = vpop.permute.xlu0 %308
        %v310 = vld [vmem:[#allocation5] sm:$0x1]
        %v311 = vlaneseq
        %v312 = vshrl.u32 %v311, 7
        %v313 = vsub.s32 0, %v312
        %v314 = vrot.slane %v310, %v313
        %v315 = vmul.f32 %v307, %v314
        %v316 = vmul.f32 %v309, %v314
        %v317 = vadd.f32 %v304, %v315
        %v318 = vadd.f32 %v305, %v316
        %319 = vrot.lane.b32.xlu0 %v257, 120
        %v320 = vpop.permute.xlu0 %319
        %321 = vrot.lane.b32.xlu0 %v258, 120
        %v322 = vpop.permute.xlu0 %321
        %v323 = vld [vmem:[#allocation5 + $0x2] sm:$0x1]
        %v324 = vlaneseq
        %v325 = vshrl.u32 %v324, 7
        %v326 = vsub.s32 0, %v325
        %v327 = vrot.slane %v323, %v326
        %v328 = vmul.f32 %v320, %v327
        %v329 = vmul.f32 %v322, %v327
        %v330 = vadd.f32 %v317, %v328
        %v331 = vadd.f32 %v318, %v329
        %332 = vrot.lane.b32.xlu0 %v221, 8
        %v333 = vpop.permute.xlu0 %332
        %334 = vrot.lane.b32.xlu0 %v222, 8
        %v335 = vpop.permute.xlu0 %334
        %v336 = vld [vmem:[#allocation5 + $0x3] sm:$0x1]
        %v337 = vlaneseq
        %v338 = vshrl.u32 %v337, 7
        %v339 = vsub.s32 0, %v338
        %v340 = vrot.slane %v336, %v339
        %v341 = vmul.f32 %v333, %v340
        %v342 = vmul.f32 %v335, %v340
        %v343 = vadd.f32 %v330, %v341
        %v344 = vadd.f32 %v331, %v342
        %345 = vrot.lane.b32.xlu0 %v221, 120
        %v346 = vpop.permute.xlu0 %345
        %347 = vrot.lane.b32.xlu0 %v222, 120
        %v348 = vpop.permute.xlu0 %347
        %v349 = vld [vmem:[#allocation5 + $0x5] sm:$0x1]
        %v350 = vlaneseq
        %v351 = vshrl.u32 %v350, 7
        %v352 = vsub.s32 0, %v351
        %v353 = vrot.slane %v349, %v352
        %v354 = vmul.f32 %v346, %v353
        %v355 = vmul.f32 %v348, %v353
        %v356 = vadd.f32 %v343, %v354
        %v357 = vadd.f32 %v344, %v355
        %358 = vrot.lane.b32.xlu0 %v270, 8
        %v359 = vpop.permute.xlu0 %358
        %360 = vrot.lane.b32.xlu0 %v271, 8
        %v361 = vpop.permute.xlu0 %360
        %v362 = vld [vmem:[#allocation5 + $0x6] sm:$0x1]
        %v363 = vlaneseq
        %v364 = vshrl.u32 %v363, 7
        %v365 = vsub.s32 0, %v364
        %v366 = vrot.slane %v362, %v365
        %v367 = vmul.f32 %v359, %v366
        %v368 = vmul.f32 %v361, %v366
        %v369 = vadd.f32 %v356, %v367
        %v370 = vadd.f32 %v357, %v368
        %371 = vrot.lane.b32.xlu0 %v270, 120
        %v372 = vpop.permute.xlu0 %371
        %373 = vrot.lane.b32.xlu0 %v271, 120
        %v374 = vpop.permute.xlu0 %373
        %v375 = vld [vmem:[#allocation5 + $0x8] sm:$0x1]
        %v376 = vlaneseq
        %v377 = vshrl.u32 %v376, 7
        %v378 = vsub.s32 0, %v377
        %v379 = vrot.slane %v375, %v378
        %v380 = vmul.f32 %v372, %v379
        %v381 = vmul.f32 %v374, %v379
        %v382 = vadd.f32 %v369, %v380
        %v383 = vadd.f32 %v370, %v381
        %384 = vst [vmem:[%s217] sm:$0xff] %v382
        %385 = vst [vmem:[%s217 + $0x8] sm:$0xff] %v383
        %s386 = sand.u32 %s111, 1
        %s387 = scalar_lea.sflag [#allocation4], %s386
        %s388 = sand.u32 %s111, 1
        %s389 = smul.addr %s388, 16
        %s390 = scalar_lea.vmem [#allocation7], %s389
        // Predicated region
        $region41: #{tpu_custom_call.1} parent=31 // pred_check
          %p391 = pneg %p121
        $region42: #{tpu_custom_call.1} parent=31 // pred_check_branch
          %393 = sbr.rel (%p391) target = $region44
        $region43: #{tpu_custom_call.1} parent=31 // pred_region
          %s394 = smul.u32 2, %s26
          %s396 = ssub.s32 256, 256
          %397 = vsyncadd %s387, %s396
          %s398 = smul.addr %s25, 2
          %s399 = sadd.s32 %s394, %s398
          %s400 = smul.addr %s399, 128
          %s401 = scalar_lea.hbm %s3, %s400
          %s402 = sshll.u32 %s390, 4
          %s403 = int_to_ptr.vmem [resolvable:$true] %s402
          %408 = dma.vmem_to_hbm [thread:$0]  %s403, 256, %s401, %s387, 128, 128, 8
        $region44: #{tpu_custom_call.1} parent=31 // pred_fallthru
          _
      $region32: #{tpu_custom_call.1} parent=5 // pred_fallthru
        _
      %p409 = scmp.le.s32.totalorder 2, %s16
      // Predicated region
      $region45: #{tpu_custom_call.1} parent=5 // pred_check
        %p410 = pneg %p409
      $region46: #{tpu_custom_call.1} parent=5 // pred_check_branch
        %412 = sbr.rel (%p410) target = $region48
      $region47: #{tpu_custom_call.1} parent=5 // pred_region
        %s413 = ssub.s32 %s16, 2
        // Predicated region
        $region49: #{tpu_custom_call.1} parent=47 // pred_check
          %p414 = pneg %p127
        $region50: #{tpu_custom_call.1} parent=47 // pred_check_branch
          %416 = sbr.rel (%p414) target = $region52
        $region51: #{tpu_custom_call.1} parent=47 // pred_region
          %s417 = sand.u32 %s112, 1
          %s418 = scalar_lea.sflag [#allocation4], %s417
          %s419 = sand.u32 %s112, 1
          %s420 = smul.addr %s419, 16
          %s421 = scalar_lea.vmem [#allocation7], %s420
          %422 = dma.done %s418, 256
        $region52: #{tpu_custom_call.1} parent=47 // pred_fallthru
          _
      $region48: #{tpu_custom_call.1} parent=5 // pred_fallthru
        _
    $region6: #{tpu_custom_call.1} parent=1 // loop_footer
      %s20 = sadd.s32 1, %s16
    $region7: #{tpu_custom_call.1} parent=1 // loop_footer_branch
      %15 = sbr.rel target = $region3
    $region8: #{tpu_custom_call.1} parent=1 // loop_exit
      _
    %423 = vsyncpa [#allocation3], 1
    %s424 = scalar_lea.sflag [#allocation3], 1
    %425 = vsyncpa %s424, 1
    %426 = vsyncpa [#allocation6], 1
    %427 = vsyncpa [#allocation4], 1
    %s428 = scalar_lea.sflag [#allocation4], 1
    %429 = vsyncpa %s428, 1

</llo_original>
